<compile_context>
chip_gen: v6e
topology: v6e:2x2x1
jax: 0.10.0
libtpu: 0.0.40
codegen_flags: <defaults>
</compile_context>

<pallas_src>
import functools
import math

import jax
import jax.numpy as jnp
from jax import lax
from jax.experimental import pallas as pl
from jax.experimental.pallas import tpu as pltpu

WEIGHT_POW = 2.0                    # the module's __init__ arg (any positive number)

_DEFAULT_BLOCK_BYTES = 2 * 1024 * 1024   # per-input block budget (native dtype)
_NUM_CORE_SPLITS = 2                      # v7x has 2 TCs/chip; harmless on v5e/v6e


def _weight(t, weight_pow):
    """|t| ** weight_pow, with cheap VPU paths for common exponents."""
    p = float(weight_pow)
    if p == 1.0:
        return jnp.abs(t)
    if p == 2.0:
        return t * t                     # even power: no abs needed
    if p.is_integer() and 2.0 < p <= 8.0:
        a = jnp.abs(t)
        w = a
        for _ in range(int(p) - 1):
            w = w * a
        return w
    return jnp.power(jnp.abs(t), jnp.float32(p))


def _uses_transcendental(weight_pow):
    p = float(weight_pow)
    return not (p in (1.0, 2.0) or (p.is_integer() and 2.0 < p <= 8.0))


def _twl1_kernel(d_ref, t_ref, num_out, den_out, num_acc, den_acc, *,
                 weight_pow, block_l, n_lead, inner_steps, total_blocks,
                 mask_possible):
    """Streams (block_l, R, C) tiles; accumulates (R, C) partial-sum planes.

    Grid = (core_split, inner_steps).  Each core (outer, "parallel" axis)
    owns leading blocks [c*inner_steps, (c+1)*inner_steps) and writes one
    (numerator, denominator) partial-sum pair.
    """
    c = pl.program_id(0)
    j = pl.program_id(1)

    @pl.when(j == 0)
    def _():
        num_acc[...] = jnp.zeros_like(num_acc)
        den_acc[...] = jnp.zeros_like(den_acc)

    d = d_ref[...].astype(jnp.float32)
    t = t_ref[...].astype(jnp.float32)

    w = _weight(t, weight_pow)
    num = jnp.abs(d - t) * w

    if mask_possible:
        # Only the ragged last block (and any fully-phantom step of the last
        # core) pays for the iota + compare + selects; everything else takes
        # the plain VALU-only accumulate.
        blk = c * inner_steps + j
        ragged = (blk + 1) * block_l > n_lead

        @pl.when(jnp.logical_not(ragged))
        def _():
            num_acc[...] += num.sum(axis=0)
            den_acc[...] += w.sum(axis=0)

        @pl.when(ragged)
        def _():
            rows = lax.broadcasted_iota(jnp.int32, d.shape, 0) + blk * block_l
            m = rows < n_lead
            num_acc[...] += jnp.where(m, num, 0.0).sum(axis=0)
            den_acc[...] += jnp.where(m, w, 0.0).sum(axis=0)
    else:
        num_acc[...] += num.sum(axis=0)
        den_acc[...] += w.sum(axis=0)

    @pl.when(j == pl.num_programs(1) - 1)
    def _():
        # One cross-lane reduce per core, in the epilogue only.
        num_out[0, 0] = jnp.sum(num_acc[...])
        den_out[0, 0] = jnp.sum(den_acc[...])


def _canonicalize_3d(x):
    """Collapse leading dims only (layout-preserving on TPU)."""
    if x.ndim == 0:
        return x.reshape(1, 1, 1)
    if x.ndim == 1:
        return x.reshape(1, 1, x.shape[0])
    if x.ndim == 2:
        return x.reshape(1, x.shape[0], x.shape[1])
    lead = math.prod(x.shape[:-2])
    return x.reshape(lead, x.shape[-2], x.shape[-1])


def target_weighted_l1_loss(data, target, weight_pow=WEIGHT_POW, *,
                            block_bytes=_DEFAULT_BLOCK_BYTES,
                            num_core_splits=_NUM_CORE_SPLITS):
    """Pallas TPU implementation of TargetWeightedL1Loss.forward.

    Returns sum(|data - target| * |target|^p) / sum(|target|^p).
    Note: if target is identically zero the denominator is 0 and the result is
    NaN/Inf, exactly like the reference module.
    """
    assert weight_pow > 0, "weight_pow must be a positive number!"
    assert data.shape == target.shape

    d3 = _canonicalize_3d(data)
    t3 = _canonicalize_3d(target)
    L, R, C = d3.shape
    itemsize = d3.dtype.itemsize

    # ---- Tiling along the leading (collapsed) axis only. ----
    row_bytes = max(1, R * C * itemsize)
    block_l = max(1, min(L, block_bytes // row_bytes))
    total_blocks = -(-L // block_l)

    num_splits = max(1, min(int(num_core_splits), total_blocks))
    inner_steps = -(-total_blocks // num_splits)
    mask_possible = (L % block_l != 0) or (num_splits * inner_steps != total_blocks)

    # ---- VMEM budget (2 inputs x 2 pipeline buffers + accumulators). ----
    block_in_bytes = block_l * R * C * itemsize
    vmem_est = 4 * block_in_bytes + 2 * R * C * 4 + (2 << 20)
    vmem_limit = int(min(max(vmem_est, 16 << 20), 40 << 20))

    # ---- Cost hint for XLA's scheduler. ----
    n = int(data.size) if data.size else 1
    cost = pl.CostEstimate(
        flops=7 * n,
        transcendentals=(n if _uses_transcendental(weight_pow) else 0),
        bytes_accessed=2 * n * itemsize + 2 * num_splits * 4,
    )

    kernel = functools.partial(
        _twl1_kernel,
        weight_pow=float(weight_pow),
        block_l=block_l,
        n_lead=L,
        inner_steps=inner_steps,
        total_blocks=total_blocks,
        mask_possible=mask_possible,
    )

    def in_map(c, j):
        # Clamp so phantom steps (last core, total_blocks not divisible by the
        # core split) re-fetch the last real block instead of DMA-ing OOB; the
        # kernel masks their contribution to exactly zero.
        blk = jnp.minimum(c * inner_steps + j, total_blocks - 1)
        return (blk, 0, 0)

    num_parts, den_parts = pl.pallas_call(
        kernel,
        out_shape=(
            jax.ShapeDtypeStruct((num_splits, 1), jnp.float32),
            jax.ShapeDtypeStruct((num_splits, 1), jnp.float32),
        ),
        grid_spec=pltpu.PrefetchScalarGridSpec(
            num_scalar_prefetch=0,
            grid=(num_splits, inner_steps),
            in_specs=[
                pl.BlockSpec((block_l, R, C), in_map),
                pl.BlockSpec((block_l, R, C), in_map),
            ],
            out_specs=[
                pl.BlockSpec((1, 1), lambda c, j: (c, 0),
                             memory_space=pltpu.SMEM),
                pl.BlockSpec((1, 1), lambda c, j: (c, 0),
                             memory_space=pltpu.SMEM),
            ],
            scratch_shapes=[
                pltpu.VMEM((R, C), jnp.float32),   # numerator partial plane
                pltpu.VMEM((R, C), jnp.float32),   # denominator partial plane
            ],
        ),
        compiler_params=pltpu.CompilerParams(
            dimension_semantics=("parallel", "arbitrary"),
            vmem_limit_bytes=vmem_limit,
        ),
        cost_estimate=cost,
    )(d3, t3)

    # Combine per-core partials + final divide in plain JAX (O(num_splits)).
    return jnp.sum(num_parts) / jnp.sum(den_parts)


def _reference(data, target, weight_pow=WEIGHT_POW):
    w = jnp.power(jnp.abs(target).astype(jnp.float32), weight_pow)
    diff = jnp.abs(data.astype(jnp.float32) - target.astype(jnp.float32)) * w
    return diff.sum() / w.sum()


if __name__ == "__main__":
    key = jax.random.PRNGKey(0)
    k1, k2 = jax.random.split(key)

    def check(shape, weight_pow=2.0, **kw):
        d = jax.random.normal(k1, shape, dtype=jnp.float32)
        t = jax.random.normal(k2, shape, dtype=jnp.float32)
        out = jax.block_until_ready(
            target_weighted_l1_loss(d, t, weight_pow, **kw))
        ref = _reference(d, t, weight_pow)
        assert jnp.allclose(out, ref, rtol=1e-5, atol=1e-5), (shape, out, ref)

    # 1) Main small NCHW case (pow == 2 fast path, single block, no split).
    check((2, 4, 16, 16))
    # 2) Multi-block + 2-core split + ragged last block + one phantom step.
    check((1, 9, 8, 128), block_bytes=4 * 8 * 128 * 4)
    # 3) Even 2-core split, no ragged block (mask path compiled out).
    check((2, 8, 8, 128), block_bytes=4 * 8 * 128 * 4)
    # 4) numel not a multiple of 128 + non-integer exponent (EUP pow path).
    check((3, 5, 7, 11), weight_pow=1.5)
    # 5) 2-D and 1-D inputs (canonicalization branches).
    check((40, 24))
    check((1000,))

    print("KERNEL_OK")
</pallas_src>

<mosaic_0001>
module attributes {stable_mosaic.version = 11 : i64} {
  func.func @_twl1_kernel(%arg0: i32, %arg1: i32, %arg2: memref<8x16x16xf32, #tpu.memory_space<vmem>>, %arg3: memref<8x16x16xf32, #tpu.memory_space<vmem>>, %arg4: memref<1x1xf32, #tpu.memory_space<smem>>, %arg5: memref<1x1xf32, #tpu.memory_space<smem>>, %arg6: memref<16x16xf32, #tpu.memory_space<vmem>>, %arg7: memref<16x16xf32, #tpu.memory_space<vmem>>) attributes {dimension_semantics = [#tpu.dimension_semantics<parallel>, #tpu.dimension_semantics<arbitrary>], iteration_bounds = array<i64: 1, 1>, scalar_prefetch = 0 : i64, scratch_operands = 2 : i64, tpu.core_type = #tpu.core_type<tc>, window_params = [{transform_indices = @transform_0, window_bounds = array<i64: 8, 16, 16>}, {transform_indices = @transform_1, window_bounds = array<i64: 8, 16, 16>}, {transform_indices = @transform_2, window_bounds = array<i64: 1, 1>}, {transform_indices = @transform_3, window_bounds = array<i64: 1, 1>}]} {
    %c0_i32 = arith.constant 0 : i32
    %0 = arith.cmpi eq, %arg1, %c0_i32 : i32
    %1 = arith.extui %0 : i1 to i32
    %c0_i32_0 = arith.constant 0 : i32
    %2 = arith.cmpi ne, %1, %c0_i32_0 : i32
    scf.if %2 {
      %cst_17 = arith.constant 0.000000e+00 : f32
      %20 = vector.broadcast %cst_17 : f32 to vector<16x16xf32>
      %c0_18 = arith.constant 0 : index
      %c0_19 = arith.constant 0 : index
      %21 = vector.load %arg6[%c0_18, %c0_19] : memref<16x16xf32, #tpu.memory_space<vmem>>, vector<16x16xf32>
      tpu.vector_store %arg6[%c0_18, %c0_19], %20 {strides = array<i32>} : memref<16x16xf32, #tpu.memory_space<vmem>>, vector<16x16xf32>,
      %cst_20 = arith.constant 0.000000e+00 : f32
      %22 = vector.broadcast %cst_20 : f32 to vector<16x16xf32>
      %c0_21 = arith.constant 0 : index
      %c0_22 = arith.constant 0 : index
      %23 = vector.load %arg7[%c0_21, %c0_22] : memref<16x16xf32, #tpu.memory_space<vmem>>, vector<16x16xf32>
      tpu.vector_store %arg7[%c0_21, %c0_22], %22 {strides = array<i32>} : memref<16x16xf32, #tpu.memory_space<vmem>>, vector<16x16xf32>,
    } else {
    }
    %c0 = arith.constant 0 : index
    %c0_1 = arith.constant 0 : index
    %c0_2 = arith.constant 0 : index
    %3 = vector.load %arg2[%c0, %c0_1, %c0_2] : memref<8x16x16xf32, #tpu.memory_space<vmem>>, vector<8x16x16xf32>
    %c0_3 = arith.constant 0 : index
    %c0_4 = arith.constant 0 : index
    %c0_5 = arith.constant 0 : index
    %4 = vector.load %arg3[%c0_3, %c0_4, %c0_5] : memref<8x16x16xf32, #tpu.memory_space<vmem>>, vector<8x16x16xf32>
    %5 = arith.mulf %4, %4 : vector<8x16x16xf32>
    %6 = arith.subf %3, %4 : vector<8x16x16xf32>
    %7 = math.absf %6 : vector<8x16x16xf32>
    %8 = arith.mulf %7, %5 : vector<8x16x16xf32>
    %c0_6 = arith.constant 0 : index
    %c0_7 = arith.constant 0 : index
    %9 = vector.load %arg6[%c0_6, %c0_7] : memref<16x16xf32, #tpu.memory_space<vmem>>, vector<16x16xf32>
    %cst = arith.constant dense<0.000000e+00> : vector<16x16xf32>
    %10 = vector.multi_reduction <add>, %8, %cst [0] : vector<8x16x16xf32> to vector<16x16xf32>
    %11 = arith.addf %9, %10 : vector<16x16xf32>
    %c0_8 = arith.constant 0 : index
    %c0_9 = arith.constant 0 : index
    %12 = vector.load %arg6[%c0_8, %c0_9] : memref<16x16xf32, #tpu.memory_space<vmem>>, vector<16x16xf32>
    tpu.vector_store %arg6[%c0_8, %c0_9], %11 {strides = array<i32>} : memref<16x16xf32, #tpu.memory_space<vmem>>, vector<16x16xf32>,
    %c0_10 = arith.constant 0 : index
    %c0_11 = arith.constant 0 : index
    %13 = vector.load %arg7[%c0_10, %c0_11] : memref<16x16xf32, #tpu.memory_space<vmem>>, vector<16x16xf32>
    %cst_12 = arith.constant dense<0.000000e+00> : vector<16x16xf32>
    %14 = vector.multi_reduction <add>, %5, %cst_12 [0] : vector<8x16x16xf32> to vector<16x16xf32>
    %15 = arith.addf %13, %14 : vector<16x16xf32>
    %c0_13 = arith.constant 0 : index
    %c0_14 = arith.constant 0 : index
    %16 = vector.load %arg7[%c0_13, %c0_14] : memref<16x16xf32, #tpu.memory_space<vmem>>, vector<16x16xf32>
    tpu.vector_store %arg7[%c0_13, %c0_14], %15 {strides = array<i32>} : memref<16x16xf32, #tpu.memory_space<vmem>>, vector<16x16xf32>,
    %c0_i32_15 = arith.constant 0 : i32
    %17 = arith.cmpi eq, %arg1, %c0_i32_15 : i32
    %18 = arith.extui %17 : i1 to i32
    %c0_i32_16 = arith.constant 0 : i32
    %19 = arith.cmpi ne, %18, %c0_i32_16 : i32
    scf.if %19 {
      %c0_17 = arith.constant 0 : index
      %c0_18 = arith.constant 0 : index
      %20 = vector.load %arg6[%c0_17, %c0_18] : memref<16x16xf32, #tpu.memory_space<vmem>>, vector<16x16xf32>
      %21 = vector.shape_cast %20 : vector<16x16xf32> to vector<1x16x16xf32>
      %cst_19 = arith.constant dense<0.000000e+00> : vector<1xf32>
      %22 = vector.multi_reduction <add>, %21, %cst_19 [1, 2] : vector<1x16x16xf32> to vector<1xf32>
      %23 = vector.shape_cast %22 : vector<1xf32> to vector<1x1x1xf32>
      %24 = vector.extract %23[0, 0, 0] : f32 from vector<1x1x1xf32>
      %c0_20 = arith.constant 0 : index
      %c0_21 = arith.constant 0 : index
      %25 = memref.load %arg4[%c0_20, %c0_21] : memref<1x1xf32, #tpu.memory_space<smem>>
      memref.store %24, %arg4[%c0_20, %c0_21] : memref<1x1xf32, #tpu.memory_space<smem>>
      %c0_22 = arith.constant 0 : index
      %c0_23 = arith.constant 0 : index
      %26 = vector.load %arg7[%c0_22, %c0_23] : memref<16x16xf32, #tpu.memory_space<vmem>>, vector<16x16xf32>
      %27 = vector.shape_cast %26 : vector<16x16xf32> to vector<1x16x16xf32>
      %cst_24 = arith.constant dense<0.000000e+00> : vector<1xf32>
      %28 = vector.multi_reduction <add>, %27, %cst_24 [1, 2] : vector<1x16x16xf32> to vector<1xf32>
      %29 = vector.shape_cast %28 : vector<1xf32> to vector<1x1x1xf32>
      %30 = vector.extract %29[0, 0, 0] : f32 from vector<1x1x1xf32>
      %c0_25 = arith.constant 0 : index
      %c0_26 = arith.constant 0 : index
      %31 = memref.load %arg5[%c0_25, %c0_26] : memref<1x1xf32, #tpu.memory_space<smem>>
      memref.store %30, %arg5[%c0_25, %c0_26] : memref<1x1xf32, #tpu.memory_space<smem>>
    } else {
    }
    return
  }
  func.func @transform_0(%arg0: i32, %arg1: i32) -> (i32, i32, i32) {
    %c1_i32 = arith.constant 1 : i32
    %0 = arith.muli %arg0, %c1_i32 : i32
    %1 = arith.addi %0, %arg1 : i32
    %c0_i32 = arith.constant 0 : i32
    %2 = arith.minsi %1, %c0_i32 : i32
    %c0_i32_0 = arith.constant 0 : i32
    %c0_i32_1 = arith.constant 0 : i32
    %c0_i32_2 = arith.constant 0 : i32
    return %2, %c0_i32_0, %c0_i32_1 : i32, i32, i32
  }
  func.func @transform_1(%arg0: i32, %arg1: i32) -> (i32, i32, i32) {
    %c1_i32 = arith.constant 1 : i32
    %0 = arith.muli %arg0, %c1_i32 : i32
    %1 = arith.addi %0, %arg1 : i32
    %c0_i32 = arith.constant 0 : i32
    %2 = arith.minsi %1, %c0_i32 : i32
    %c0_i32_0 = arith.constant 0 : i32
    %c0_i32_1 = arith.constant 0 : i32
    %c0_i32_2 = arith.constant 0 : i32
    return %2, %c0_i32_0, %c0_i32_1 : i32, i32, i32
  }
  func.func @transform_2(%arg0: i32, %arg1: i32) -> (i32, i32) {
    %c0_i32 = arith.constant 0 : i32
    %c0_i32_0 = arith.constant 0 : i32
    return %arg0, %c0_i32 : i32, i32
  }
  func.func @transform_3(%arg0: i32, %arg1: i32) -> (i32, i32) {
    %c0_i32 = arith.constant 0 : i32
    %c0_i32_0 = arith.constant 0 : i32
    return %arg0, %c0_i32 : i32, i32
  }
}

</mosaic_0001>

<llo_original>
// kernel: tpu_custom_call.1
$region0: #{tpu_custom_call.1}
  #allocation0 [shape = 'u32[]', space=smem, size = 0x4, offset = 0x4, fixed_abs, tag = 'smem constant byte address 0x4 - core index']
  #allocation1 [shape = 'u32[144,128]{1,0:T(1,128)}', space=vmem, size = 0x12000, scoped, tag = 'internal scratch']
  #allocation2 [shape = 'f32[16,16]{1,0:T(8,128)}', space=vmem, size = 0x2000, scoped, tag = 'scratch operand']
  #allocation3 [shape = 'f32[16,16]{1,0:T(8,128)}', space=vmem, size = 0x2000, scoped, tag = 'scratch operand']
  %s0 = inlined_call_operand.hbm [shape: f32[8,16,16], index: 0, kind: input, shape index: {}]
  %s1 = inlined_call_operand.hbm [shape: f32[8,16,16], index: 1, kind: input, shape index: {}]
  %s2 = inlined_call_operand.hbm [shape: f32[1,1], index: 2, kind: output, shape index: {0}]
  %s3 = inlined_call_operand.hbm [shape: f32[1,1], index: 3, kind: output, shape index: {1}]
  %4 = xla_tuple %s2, %s3
  %s5 = sld [smem:[#allocation0]]
  $region42: #{tpu_custom_call.1} parent=0
    _
  %s7 = ssub.s32 1, %s5
  %s8 = scalar_select 0, %s7, %s5
  $region1: #{tpu_custom_call.1} parent=0
    #allocation4 [shape = 'u8[65536]{0}', space=vmem, size = 0x10000, scoped, tag = 'input window, operand 0, single buffered']
    #allocation5 [shape = 's32[1]{0}', space=sflag, size = 0x4, scoped, tag = 'scoped memory for tpu_custom_call.1']
    #allocation6 [shape = 's32[1]{0}', space=sflag, size = 0x4, scoped, tag = 'scoped memory for tpu_custom_call.1']
    #allocation7 [shape = 'u8[65536]{0}', space=vmem, size = 0x10000, scoped, tag = 'input window, operand 1, single buffered']
    #allocation8 [shape = 's32[1]{0}', space=sflag, size = 0x4, scoped, tag = 'scoped memory for tpu_custom_call.1']
    #allocation9 [shape = 'u8[512]{0}', space=smem, size = 0x200, scoped, tag = 'output window, operand 0, single buffered']
    #allocation10 [shape = 'u8[512]{0}', space=smem, size = 0x200, scoped, tag = 'output window, operand 1, single buffered']
    #allocation11 [shape = 's32[1]{0}', space=sflag, size = 0x4, scoped, tag = 'scoped memory for tpu_custom_call.1']
    %9 = vsyncpa [#allocation5], 0
    %10 = vsyncpa [#allocation8], 0
    %11 = vsyncpa [#allocation6], 0
    %12 = vsyncpa [#allocation11], 0
    // Predicated region
    $region2: #{tpu_custom_call.1} parent=1 // pred_check
      _
    $region3: #{tpu_custom_call.1} parent=1 // pred_check_branch
      %14 = sbr.rel (0) target = $region5
    $region4: #{tpu_custom_call.1} parent=1 // pred_region
      %s15 = sadd.s32 0, 0
      %p16 = scmp.lt.s32.totalorder %s15, 0
      %s17 = scalar_select %p16, %s15, 0
      %s18 = smul.u32 8, %s17
      %s20 = ssub.s32 2048, 2048
      %21 = vsyncadd [#allocation5], %s20
      %s22 = smul.addr %s18, 2
      %s23 = smul.addr %s22, 128
      %s24 = scalar_lea.hbm %s0, %s23
      %s25 = sshll.u32 [#allocation4], 4
      %s26 = int_to_ptr.vmem [resolvable:$true] %s25
      %31 = dma.hbm_to_vmem [thread:$0]  %s24, 2048, %s26, [#allocation5], 128, 128, 8
    $region5: #{tpu_custom_call.1} parent=1 // pred_fallthru
      _
    // Predicated region
    $region6: #{tpu_custom_call.1} parent=1 // pred_check
      _
    $region7: #{tpu_custom_call.1} parent=1 // pred_check_branch
      %33 = sbr.rel (0) target = $region9
    $region8: #{tpu_custom_call.1} parent=1 // pred_region
      %s34 = sadd.s32 0, 0
      %p35 = scmp.lt.s32.totalorder %s34, 0
      %s36 = scalar_select %p35, %s34, 0
      %s37 = smul.u32 8, %s36
      %s39 = ssub.s32 2048, 2048
      %40 = vsyncadd [#allocation8], %s39
      %s41 = smul.addr %s37, 2
      %s42 = smul.addr %s41, 128
      %s43 = scalar_lea.hbm %s1, %s42
      %s44 = sshll.u32 [#allocation7], 4
      %s45 = int_to_ptr.vmem [resolvable:$true] %s44
      %50 = dma.hbm_to_vmem [thread:$0]  %s43, 2048, %s45, [#allocation8], 128, 128, 8
    $region9: #{tpu_custom_call.1} parent=1 // pred_fallthru
      _
    // Predicated region
    $region10: #{tpu_custom_call.1} parent=1 // pred_check
      _
    $region11: #{tpu_custom_call.1} parent=1 // pred_check_branch
      %52 = sbr.rel (0) target = $region13
    $region12: #{tpu_custom_call.1} parent=1 // pred_region
      %53 = dma.done [#allocation5], 2048
    $region13: #{tpu_custom_call.1} parent=1 // pred_fallthru
      _
    // Predicated region
    $region14: #{tpu_custom_call.1} parent=1 // pred_check
      _
    $region15: #{tpu_custom_call.1} parent=1 // pred_check_branch
      %55 = sbr.rel (0) target = $region17
    $region16: #{tpu_custom_call.1} parent=1 // pred_region
      %56 = dma.done [#allocation8], 2048
    $region17: #{tpu_custom_call.1} parent=1 // pred_fallthru
      _
    %s57 = sadd.s32 0, 0
    %p58 = scmp.lt.s32.totalorder %s57, 0
    %s59 = scalar_select %p58, %s57, 0
    %s60 = smul.u32 8, %s59
    %s61 = sadd.s32 0, 0
    %p62 = scmp.lt.s32.totalorder %s61, 0
    %s63 = scalar_select %p62, %s61, 0
    %s64 = smul.u32 8, %s63
    %p65 = scmp.eq.s32.totalorder 0, 0
    // Predicated region
    $region18: #{tpu_custom_call.1} parent=1 // pred_check
      %p66 = pneg %p65
    $region19: #{tpu_custom_call.1} parent=1 // pred_check_branch
      %68 = sbr.rel (%p66) target = $region21
    $region20: #{tpu_custom_call.1} parent=1 // pred_region
      %vm69 = vcmask 130048
      %70 = vst.msk [vmem:[#allocation2] sm:$0xff] %vm69, 0.0
      %71 = vst.msk [vmem:[#allocation2 + $0x8] sm:$0xff] %vm69, 0.0
      %72 = vst.msk [vmem:[#allocation3] sm:$0xff] %vm69, 0.0
      %73 = vst.msk [vmem:[#allocation3 + $0x8] sm:$0xff] %vm69, 0.0
    $region21: #{tpu_custom_call.1} parent=1 // pred_fallthru
      _
    %v74 = vld [vmem:[#allocation4] sm:$0xff]
    %v75 = vld [vmem:[#allocation4 + $0x8] sm:$0xff]
    %v76 = vld [vmem:[#allocation4 + $0x10] sm:$0xff]
    %v77 = vld [vmem:[#allocation4 + $0x18] sm:$0xff]
    %v78 = vld [vmem:[#allocation4 + $0x20] sm:$0xff]
    %v79 = vld [vmem:[#allocation4 + $0x28] sm:$0xff]
    %v80 = vld [vmem:[#allocation4 + $0x30] sm:$0xff]
    %v81 = vld [vmem:[#allocation4 + $0x38] sm:$0xff]
    %v82 = vld [vmem:[#allocation4 + $0x40] sm:$0xff]
    %v83 = vld [vmem:[#allocation4 + $0x48] sm:$0xff]
    %v84 = vld [vmem:[#allocation4 + $0x50] sm:$0xff]
    %v85 = vld [vmem:[#allocation4 + $0x58] sm:$0xff]
    %v86 = vld [vmem:[#allocation4 + $0x60] sm:$0xff]
    %v87 = vld [vmem:[#allocation4 + $0x68] sm:$0xff]
    %v88 = vld [vmem:[#allocation4 + $0x70] sm:$0xff]
    %v89 = vld [vmem:[#allocation4 + $0x78] sm:$0xff]
    %v90 = vld [vmem:[#allocation7] sm:$0xff]
    %v91 = vld [vmem:[#allocation7 + $0x8] sm:$0xff]
    %v92 = vld [vmem:[#allocation7 + $0x10] sm:$0xff]
    %v93 = vld [vmem:[#allocation7 + $0x18] sm:$0xff]
    %v94 = vld [vmem:[#allocation7 + $0x20] sm:$0xff]
    %v95 = vld [vmem:[#allocation7 + $0x28] sm:$0xff]
    %v96 = vld [vmem:[#allocation7 + $0x30] sm:$0xff]
    %v97 = vld [vmem:[#allocation7 + $0x38] sm:$0xff]
    %v98 = vld [vmem:[#allocation7 + $0x40] sm:$0xff]
    %v99 = vld [vmem:[#allocation7 + $0x48] sm:$0xff]
    %v100 = vld [vmem:[#allocation7 + $0x50] sm:$0xff]
    %v101 = vld [vmem:[#allocation7 + $0x58] sm:$0xff]
    %v102 = vld [vmem:[#allocation7 + $0x60] sm:$0xff]
    %v103 = vld [vmem:[#allocation7 + $0x68] sm:$0xff]
    %v104 = vld [vmem:[#allocation7 + $0x70] sm:$0xff]
    %v105 = vld [vmem:[#allocation7 + $0x78] sm:$0xff]
    %v106 = vmul.f32 %v90, %v90
    %v107 = vmul.f32 %v91, %v91
    %v108 = vmul.f32 %v92, %v92
    %v109 = vmul.f32 %v93, %v93
    %v110 = vmul.f32 %v94, %v94
    %v111 = vmul.f32 %v95, %v95
    %v112 = vmul.f32 %v96, %v96
    %v113 = vmul.f32 %v97, %v97
    %v114 = vmul.f32 %v98, %v98
    %v115 = vmul.f32 %v99, %v99
    %v116 = vmul.f32 %v100, %v100
    %v117 = vmul.f32 %v101, %v101
    %v118 = vmul.f32 %v102, %v102
    %v119 = vmul.f32 %v103, %v103
    %v120 = vmul.f32 %v104, %v104
    %v121 = vmul.f32 %v105, %v105
    %v122 = vsub.f32 %v74, %v90
    %v123 = vsub.f32 %v75, %v91
    %v124 = vsub.f32 %v76, %v92
    %v125 = vsub.f32 %v77, %v93
    %v126 = vsub.f32 %v78, %v94
    %v127 = vsub.f32 %v79, %v95
    %v128 = vsub.f32 %v80, %v96
    %v129 = vsub.f32 %v81, %v97
    %v130 = vsub.f32 %v82, %v98
    %v131 = vsub.f32 %v83, %v99
    %v132 = vsub.f32 %v84, %v100
    %v133 = vsub.f32 %v85, %v101
    %v134 = vsub.f32 %v86, %v102
    %v135 = vsub.f32 %v87, %v103
    %v136 = vsub.f32 %v88, %v104
    %v137 = vsub.f32 %v89, %v105
    %v138 = vand.u32 2147483647, %v122
    %v139 = vand.u32 2147483647, %v123
    %v140 = vand.u32 2147483647, %v124
    %v141 = vand.u32 2147483647, %v125
    %v142 = vand.u32 2147483647, %v126
    %v143 = vand.u32 2147483647, %v127
    %v144 = vand.u32 2147483647, %v128
    %v145 = vand.u32 2147483647, %v129
    %v146 = vand.u32 2147483647, %v130
    %v147 = vand.u32 2147483647, %v131
    %v148 = vand.u32 2147483647, %v132
    %v149 = vand.u32 2147483647, %v133
    %v150 = vand.u32 2147483647, %v134
    %v151 = vand.u32 2147483647, %v135
    %v152 = vand.u32 2147483647, %v136
    %v153 = vand.u32 2147483647, %v137
    %v154 = vmul.f32 %v138, %v106
    %v155 = vmul.f32 %v139, %v107
    %v156 = vmul.f32 %v140, %v108
    %v157 = vmul.f32 %v141, %v109
    %v158 = vmul.f32 %v142, %v110
    %v159 = vmul.f32 %v143, %v111
    %v160 = vmul.f32 %v144, %v112
    %v161 = vmul.f32 %v145, %v113
    %v162 = vmul.f32 %v146, %v114
    %v163 = vmul.f32 %v147, %v115
    %v164 = vmul.f32 %v148, %v116
    %v165 = vmul.f32 %v149, %v117
    %v166 = vmul.f32 %v150, %v118
    %v167 = vmul.f32 %v151, %v119
    %v168 = vmul.f32 %v152, %v120
    %v169 = vmul.f32 %v153, %v121
    %v170 = vld [vmem:[#allocation2] sm:$0xff]
    %v171 = vld [vmem:[#allocation2 + $0x8] sm:$0xff]
    %vm172 = vcmask 130048
    %v173 = vsel %vm172, %v154, 0.0
    %v174 = vsel %vm172, %v156, 0.0
    %v175 = vadd.f32 %v173, %v174
    %v176 = vsel %vm172, %v158, 0.0
    %v177 = vadd.f32 %v175, %v176
    %v178 = vsel %vm172, %v160, 0.0
    %v179 = vadd.f32 %v177, %v178
    %v180 = vsel %vm172, %v162, 0.0
    %v181 = vadd.f32 %v179, %v180
    %v182 = vsel %vm172, %v164, 0.0
    %v183 = vadd.f32 %v181, %v182
    %v184 = vsel %vm172, %v166, 0.0
    %v185 = vadd.f32 %v183, %v184
    %v186 = vsel %vm172, %v168, 0.0
    %v187 = vadd.f32 %v185, %v186
    %v188 = vsel %vm172, %v155, 0.0
    %v189 = vsel %vm172, %v157, 0.0
    %v190 = vadd.f32 %v188, %v189
    %v191 = vsel %vm172, %v159, 0.0
    %v192 = vadd.f32 %v190, %v191
    %v193 = vsel %vm172, %v161, 0.0
    %v194 = vadd.f32 %v192, %v193
    %v195 = vsel %vm172, %v163, 0.0
    %v196 = vadd.f32 %v194, %v195
    %v197 = vsel %vm172, %v165, 0.0
    %v198 = vadd.f32 %v196, %v197
    %v199 = vsel %vm172, %v167, 0.0
    %v200 = vadd.f32 %v198, %v199
    %v201 = vsel %vm172, %v169, 0.0
    %v202 = vadd.f32 %v200, %v201
    %v203 = vadd.f32 %v170, %v187
    %v204 = vadd.f32 %v171, %v202
    %205 = vst.msk [vmem:[#allocation2] sm:$0xff] %vm172, %v203
    %206 = vst.msk [vmem:[#allocation2 + $0x8] sm:$0xff] %vm172, %v204
    %v207 = vld [vmem:[#allocation3] sm:$0xff]
    %v208 = vld [vmem:[#allocation3 + $0x8] sm:$0xff]
    %v209 = vsel %vm172, %v106, 0.0
    %v210 = vsel %vm172, %v108, 0.0
    %v211 = vadd.f32 %v209, %v210
    %v212 = vsel %vm172, %v110, 0.0
    %v213 = vadd.f32 %v211, %v212
    %v214 = vsel %vm172, %v112, 0.0
    %v215 = vadd.f32 %v213, %v214
    %v216 = vsel %vm172, %v114, 0.0
    %v217 = vadd.f32 %v215, %v216
    %v218 = vsel %vm172, %v116, 0.0
    %v219 = vadd.f32 %v217, %v218
    %v220 = vsel %vm172, %v118, 0.0
    %v221 = vadd.f32 %v219, %v220
    %v222 = vsel %vm172, %v120, 0.0
    %v223 = vadd.f32 %v221, %v222
    %v224 = vsel %vm172, %v107, 0.0
    %v225 = vsel %vm172, %v109, 0.0
    %v226 = vadd.f32 %v224, %v225
    %v227 = vsel %vm172, %v111, 0.0
    %v228 = vadd.f32 %v226, %v227
    %v229 = vsel %vm172, %v113, 0.0
    %v230 = vadd.f32 %v228, %v229
    %v231 = vsel %vm172, %v115, 0.0
    %v232 = vadd.f32 %v230, %v231
    %v233 = vsel %vm172, %v117, 0.0
    %v234 = vadd.f32 %v232, %v233
    %v235 = vsel %vm172, %v119, 0.0
    %v236 = vadd.f32 %v234, %v235
    %v237 = vsel %vm172, %v121, 0.0
    %v238 = vadd.f32 %v236, %v237
    %v239 = vadd.f32 %v207, %v223
    %v240 = vadd.f32 %v208, %v238
    %241 = vst.msk [vmem:[#allocation3] sm:$0xff] %vm172, %v239
    %242 = vst.msk [vmem:[#allocation3 + $0x8] sm:$0xff] %vm172, %v240
    // Predicated region
    $region22: #{tpu_custom_call.1} parent=1 // pred_check
      %p243 = pneg %p65
    $region23: #{tpu_custom_call.1} parent=1 // pred_check_branch
      %245 = sbr.rel (%p243) target = $region25
    $region24: #{tpu_custom_call.1} parent=1 // pred_region
      %v246 = vld [vmem:[#allocation2] sm:$0xff]
      %v247 = vld [vmem:[#allocation2 + $0x8] sm:$0xff]
      %v248 = vsel %vm172, %v246, 0.0
      %v249 = vsel %vm172, %v247, 0.0
      %v250 = vadd.f32 %v248, %v249
      %251 = vadd.xlane.f32.xlu0 %v250
      %v252 = vpop.xlane.xlu0 %251
      %v253 = vrot.slane %v252, 4
      %v254 = vadd.f32 %v252, %v253
      %v255 = vrot.slane %v254, 2
      %v256 = vadd.f32 %v254, %v255
      %v257 = vrot.slane %v256, 1
      %v258 = vadd.f32 %v256, %v257
      %s259 = vtos %v258
      %s260 = scalar_lea.smem [#allocation9], 0
      %261 = sst [smem:[%s260]] %s259
      %v262 = vld [vmem:[#allocation3] sm:$0xff]
      %v263 = vld [vmem:[#allocation3 + $0x8] sm:$0xff]
      %v264 = vsel %vm172, %v262, 0.0
      %v265 = vsel %vm172, %v263, 0.0
      %v266 = vadd.f32 %v264, %v265
      %267 = vadd.xlane.f32.xlu0 %v266
      %v268 = vpop.xlane.xlu0 %267
      %v269 = vrot.slane %v268, 4
      %v270 = vadd.f32 %v268, %v269
      %v271 = vrot.slane %v270, 2
      %v272 = vadd.f32 %v270, %v271
      %v273 = vrot.slane %v272, 1
      %v274 = vadd.f32 %v272, %v273
      %s275 = vtos %v274
      %s276 = scalar_lea.smem [#allocation10], 0
      %277 = sst [smem:[%s276]] %s275
    $region25: #{tpu_custom_call.1} parent=1 // pred_fallthru
      _
    // Predicated region
    $region26: #{tpu_custom_call.1} parent=1 // pred_check
      _
    $region27: #{tpu_custom_call.1} parent=1 // pred_check_branch
      %279 = sbr.rel (0) target = $region29
    $region28: #{tpu_custom_call.1} parent=1 // pred_region
      %s281 = ssub.s32 16, 16
      %282 = vsyncadd [#allocation6], %s281
      %285 = dma.smem_to_hbm [#allocation9], 16, %s2, [#allocation6]
    $region29: #{tpu_custom_call.1} parent=1 // pred_fallthru
      _
    // Predicated region
    $region30: #{tpu_custom_call.1} parent=1 // pred_check
      _
    $region31: #{tpu_custom_call.1} parent=1 // pred_check_branch
      %287 = sbr.rel (0) target = $region33
    $region32: #{tpu_custom_call.1} parent=1 // pred_region
      %s289 = ssub.s32 16, 16
      %290 = vsyncadd [#allocation11], %s289
      %293 = dma.smem_to_hbm [#allocation10], 16, %s3, [#allocation11]
    $region33: #{tpu_custom_call.1} parent=1 // pred_fallthru
      _
    // Predicated region
    $region34: #{tpu_custom_call.1} parent=1 // pred_check
      _
    $region35: #{tpu_custom_call.1} parent=1 // pred_check_branch
      %295 = sbr.rel (0) target = $region37
    $region36: #{tpu_custom_call.1} parent=1 // pred_region
      %296 = dma.done [#allocation6], 16
    $region37: #{tpu_custom_call.1} parent=1 // pred_fallthru
      _
    // Predicated region
    $region38: #{tpu_custom_call.1} parent=1 // pred_check
      _
    $region39: #{tpu_custom_call.1} parent=1 // pred_check_branch
      %298 = sbr.rel (0) target = $region41
    $region40: #{tpu_custom_call.1} parent=1 // pred_region
      %299 = dma.done [#allocation11], 16
    $region41: #{tpu_custom_call.1} parent=1 // pred_fallthru
      _
    %300 = sfence
    %301 = vsyncpa [#allocation5], 1
    %302 = vsyncpa [#allocation8], 1
    %303 = vsyncpa [#allocation6], 1
    %304 = vsyncpa [#allocation11], 1

</llo_original>
